<compile_context>
chip_gen: v6e
topology: v6e:2x2x1
jax: 0.10.0
libtpu: 0.0.40
codegen_flags: <defaults>
</compile_context>

<pallas_src>
import functools
import math

import jax
import jax.numpy as jnp
from jax import lax
from jax.experimental import pallas as pl
from jax.experimental.pallas import tpu as pltpu


# ----------------------------------------------------------------------------
# Tiling helper: largest tile <= pref that is a multiple of `base` and divides
# `dim`; otherwise fall back to the full dim (always legal for BlockSpec).
# Per-generation tuning: 256/512 tiles suit v6e/v7x MXU; they are 128-multiples
# so they remain legal (just not faster) on v5e.
# ----------------------------------------------------------------------------
def _tile(dim, pref, base):
    if dim <= pref:
        return dim
    t = (pref // base) * base
    while t >= base:
        if dim % t == 0:
            return t
        t -= base
    return dim


# ----------------------------------------------------------------------------
# Fused tiled matmul:  out = epilogue(x @ W [+ b] [gelu] [+ residual])
# ----------------------------------------------------------------------------
def _matmul_kernel(*refs, has_bias, has_residual, activation):
    x_ref, w_ref = refs[0], refs[1]
    idx = 2
    b_ref = None
    r_ref = None
    if has_bias:
        b_ref = refs[idx]
        idx += 1
    if has_residual:
        r_ref = refs[idx]
        idx += 1
    o_ref = refs[idx]
    acc_ref = refs[idx + 1]

    @pl.when(pl.program_id(2) == 0)
    def _():
        acc_ref[...] = jnp.zeros_like(acc_ref)

    acc_ref[...] += jnp.dot(x_ref[...], w_ref[...],
                            preferred_element_type=jnp.float32)

    @pl.when(pl.program_id(2) == pl.num_programs(2) - 1)
    def _():
        out = acc_ref[...]
        if has_bias:
            out = out + b_ref[...].astype(jnp.float32)
        if activation == "gelu":
            # TODO(synk): nn.GELU() is exact erf-GELU; in-kernel we use the tanh approximation
            # (EUP-friendly, |diff| ~1e-3) to guarantee Mosaic lowering.
            out = 0.5 * out * (1.0 + jnp.tanh(
                0.7978845608028654 * (out + 0.044715 * out * out * out)))
        if has_residual:
            out = out + r_ref[...].astype(jnp.float32)
        o_ref[...] = out.astype(o_ref.dtype)


def fused_linear(x, w, bias=None, residual=None, activation=None,
                 out_dtype=jnp.float32, tm_pref=256, tn_pref=256, tk_pref=512):
    m, k = x.shape
    _, n = w.shape
    xb = x.astype(jnp.bfloat16)
    wb = w.astype(jnp.bfloat16)

    tm = _tile(m, tm_pref, 8)
    tn = _tile(n, tn_pref, 128)
    tk = _tile(k, tk_pref, 128)
    grid = (m // tm, n // tn, k // tk)

    in_specs = [pl.BlockSpec((tm, tk), lambda i, j, kk: (i, kk)),
                pl.BlockSpec((tk, tn), lambda i, j, kk: (kk, j))]
    args = [xb, wb]
    if bias is not None:
        in_specs.append(pl.BlockSpec((1, tn), lambda i, j, kk: (0, j)))
        args.append(bias.reshape(1, n).astype(jnp.float32))
    if residual is not None:
        in_specs.append(pl.BlockSpec((tm, tn), lambda i, j, kk: (i, j)))
        args.append(residual)

    kernel = functools.partial(_matmul_kernel,
                               has_bias=bias is not None,
                               has_residual=residual is not None,
                               activation=activation)
    return pl.pallas_call(
        kernel,
        out_shape=jax.ShapeDtypeStruct((m, n), out_dtype),
        grid=grid,
        in_specs=in_specs,
        out_specs=pl.BlockSpec((tm, tn), lambda i, j, kk: (i, j)),
        scratch_shapes=[pltpu.VMEM((tm, tn), jnp.float32)],
        compiler_params=pltpu.CompilerParams(
            dimension_semantics=("parallel", "parallel", "arbitrary")),
    )(*args)


# ----------------------------------------------------------------------------
# LayerNorm (eps=1e-5), tiled over rows
# ----------------------------------------------------------------------------
def _layernorm_kernel(x_ref, g_ref, b_ref, o_ref):
    x = x_ref[...].astype(jnp.float32)
    mu = jnp.mean(x, axis=-1, keepdims=True)
    var = jnp.mean(jnp.square(x - mu), axis=-1, keepdims=True)
    xn = (x - mu) * lax.rsqrt(var + 1e-5)
    o_ref[...] = (xn * g_ref[...] + b_ref[...]).astype(o_ref.dtype)


def layernorm(x2d, gamma, beta, out_dtype=jnp.float32, tm_pref=256):
    m, d = x2d.shape
    tm = _tile(m, tm_pref, 8)
    return pl.pallas_call(
        _layernorm_kernel,
        out_shape=jax.ShapeDtypeStruct((m, d), out_dtype),
        grid=(m // tm,),
        in_specs=[pl.BlockSpec((tm, d), lambda i: (i, 0)),
                  pl.BlockSpec((1, d), lambda i: (0, 0)),
                  pl.BlockSpec((1, d), lambda i: (0, 0))],
        out_specs=pl.BlockSpec((tm, d), lambda i: (i, 0)),
        compiler_params=pltpu.CompilerParams(dimension_semantics=("parallel",)),
    )(x2d, gamma.reshape(1, d).astype(jnp.float32),
      beta.reshape(1, d).astype(jnp.float32))


# ----------------------------------------------------------------------------
# Flash attention: online softmax, causal block skipping
# ----------------------------------------------------------------------------
def _flash_attn_kernel(q_ref, k_ref, v_ref, o_ref, m_sc, l_sc, acc_sc,
                       *, scale, tq, tkv):
    kj = pl.program_id(2)

    @pl.when(kj == 0)
    def _():
        m_sc[...] = jnp.full_like(m_sc, -jnp.inf)
        l_sc[...] = jnp.zeros_like(l_sc)
        acc_sc[...] = jnp.zeros_like(acc_sc)

    q_start = pl.program_id(1) * tq
    k_start = kj * tkv

    # Causal skip: this KV tile is entirely in the future of the whole Q tile.
    @pl.when(k_start <= q_start + tq - 1)
    def _():
        q = q_ref[0]                                             # (tq, Dh) bf16
        k = k_ref[0]                                             # (tkv, Dh) bf16
        s = lax.dot_general(q, k, (((1,), (1,)), ((), ())),
                            preferred_element_type=jnp.float32) * scale   # (tq, tkv)

        row = q_start + lax.broadcasted_iota(jnp.int32, (tq, tkv), 0)
        col = k_start + lax.broadcasted_iota(jnp.int32, (tq, tkv), 1)
        s = jnp.where(col <= row, s, -1e30)

        m_prev = m_sc[...]
        m_new = jnp.maximum(m_prev, jnp.max(s, axis=-1, keepdims=True))
        alpha = jnp.exp(m_prev - m_new)
        p = jnp.exp(s - m_new)
        l_sc[...] = alpha * l_sc[...] + jnp.sum(p, axis=-1, keepdims=True)
        pv = jnp.dot(p.astype(jnp.bfloat16), v_ref[0],
                     preferred_element_type=jnp.float32)
        acc_sc[...] = alpha * acc_sc[...] + pv
        m_sc[...] = m_new

    @pl.when(kj == pl.num_programs(2) - 1)
    def _():
        inv = pl.reciprocal(l_sc[...], approx=True)
        o_ref[0] = (acc_sc[...] * inv).astype(o_ref.dtype)


def flash_attention(q, k, v, *, tq_pref=128, tkv_pref=128):
    """q, k, v: (B*H, S, Dh) bf16 -> (B*H, S, Dh) bf16, causal."""
    bh, s_len, dh = q.shape
    tq = _tile(s_len, tq_pref, 8)
    tkv = _tile(s_len, tkv_pref, 128)
    scale = 1.0 / math.sqrt(dh)       # softmax_scale=None -> 1/sqrt(head_dim)

    q_spec = pl.BlockSpec((1, tq, dh), lambda b, i, j: (b, i, 0))
    kv_spec = pl.BlockSpec((1, tkv, dh), lambda b, i, j: (b, j, 0))

    kernel = functools.partial(_flash_attn_kernel, scale=scale, tq=tq, tkv=tkv)
    return pl.pallas_call(
        kernel,
        out_shape=jax.ShapeDtypeStruct((bh, s_len, dh), jnp.bfloat16),
        grid=(bh, s_len // tq, s_len // tkv),
        in_specs=[q_spec, kv_spec, kv_spec],
        out_specs=q_spec,
        scratch_shapes=[pltpu.VMEM((tq, 1), jnp.float32),
                        pltpu.VMEM((tq, 1), jnp.float32),
                        pltpu.VMEM((tq, dh), jnp.float32)],
        compiler_params=pltpu.CompilerParams(
            dimension_semantics=("parallel", "parallel", "arbitrary")),
    )(q, k, v)


# ----------------------------------------------------------------------------
# LoRA adapters, all routers fused into one kernel.
#   out = x2 + sum_i g_i * (x2 @ A_i) @ B_i   (rank intermediate stays in VMEM)
# ----------------------------------------------------------------------------
def _lora_kernel(x_ref, a_ref, b_ref, g_ref, o_ref):
    x = x_ref[...]                                                 # (tm, D) f32
    h = jnp.dot(x.astype(jnp.bfloat16), a_ref[...],
                preferred_element_type=jnp.float32)                # (tm, R*r)
    h = h * g_ref[...]                                             # per-row gates, expanded
    o = jnp.dot(h.astype(jnp.bfloat16), b_ref[...],
                preferred_element_type=jnp.float32)                # (tm, D)
    o_ref[...] = (o + x).astype(o_ref.dtype)                       # fused x2 residual


def lora_adapters(x2, a_stack, b_stack, gates_rows, tm_pref=256):
    m, d = x2.shape
    rr = a_stack.shape[1]
    tm = _tile(m, tm_pref, 8)
    return pl.pallas_call(
        _lora_kernel,
        out_shape=jax.ShapeDtypeStruct((m, d), jnp.float32),
        grid=(m // tm,),
        in_specs=[pl.BlockSpec((tm, d), lambda i: (i, 0)),
                  pl.BlockSpec((d, rr), lambda i: (0, 0)),
                  pl.BlockSpec((rr, d), lambda i: (0, 0)),
                  pl.BlockSpec((tm, rr), lambda i: (i, 0))],
        out_specs=pl.BlockSpec((tm, d), lambda i: (i, 0)),
        compiler_params=pltpu.CompilerParams(dimension_semantics=("parallel",)),
    )(x2, a_stack.astype(jnp.bfloat16), b_stack.astype(jnp.bfloat16), gates_rows)


# ----------------------------------------------------------------------------
# RoPE tables / application (glue; PyTorch applies RotaryEmbedding before flash-attn)
# ----------------------------------------------------------------------------
def rope_tables(seq, head_dim, base=10000.0):
    pos = jnp.arange(seq, dtype=jnp.float32)
    inv_freq = 1.0 / (base ** (jnp.arange(0, head_dim, 2, dtype=jnp.float32) / head_dim))
    freqs = jnp.outer(pos, inv_freq)          # (S, Dh/2)
    return jnp.cos(freqs), jnp.sin(freqs)


def apply_rope(x, cos, sin):
    """Non-interleaved (NeoX-style) rotary over the full head_dim. x: (B*H, S, Dh)."""
    d2 = x.shape[-1] // 2
    x1, x2 = x[..., :d2], x[..., d2:]
    return jnp.concatenate([x1 * cos - x2 * sin, x1 * sin + x2 * cos], axis=-1)


# ----------------------------------------------------------------------------
# Full block forward
# ----------------------------------------------------------------------------
def flash_attention_block_forward(params, x, n_head, routers, lora_rank=8):
    b, s, d = x.shape
    h = n_head
    dh = d // h
    x2d = x.reshape(b * s, d)

    # --- qkv projection (no bias), bf16 activation ---
    qkv = fused_linear(x2d, params["w_qkv"], out_dtype=jnp.bfloat16)       # (B*S, 3D)
    qkv = qkv.reshape(b, s, 3, h, dh)
    # TODO(synk): express this head-split relayout via attention BlockSpec index_maps and fuse
    # RoPE (pltpu.roll) into the attention prologue instead of XLA transposes + a JAX rope pass.
    q = qkv[:, :, 0].transpose(0, 2, 1, 3).reshape(b * h, s, dh)
    k = qkv[:, :, 1].transpose(0, 2, 1, 3).reshape(b * h, s, dh)
    v = qkv[:, :, 2].transpose(0, 2, 1, 3).reshape(b * h, s, dh)

    # --- rotary embedding on q, k (fp32 compute, bf16 to the MXU) ---
    cos, sin = rope_tables(s, dh)
    q = apply_rope(q.astype(jnp.float32), cos, sin).astype(jnp.bfloat16)
    k = apply_rope(k.astype(jnp.float32), cos, sin).astype(jnp.bfloat16)

    # --- causal flash attention (online softmax, KV-tiled, causal tile skipping) ---
    y = flash_attention(q, k, v)                                           # (B*H, S, Dh) bf16
    y = y.reshape(b, h, s, dh).transpose(0, 2, 1, 3).reshape(b * s, d)

    # --- output projection (no bias) with residual add fused into the epilogue ---
    attn_out = fused_linear(y, params["w_o"], residual=x2d)                # (B*S, D) f32
    # attn_dropout is identity in eval mode (dropout_p = 0)

    x2 = layernorm(attn_out, params["ln1_g"], params["ln1_b"])             # (B*S, D) f32
    x2_3d = x2.reshape(b, s, d)

    # --- router ---
    x_mean = jnp.mean(x2_3d, axis=1)                                       # (B, D)
    logits = fused_linear(x_mean, params["w_router"], bias=params["b_router"]) / params["tau"]
    g = jax.nn.softmax(logits, axis=-1)                                    # (B, routers)

    # --- LoRA adapters (stacked, gated, residual-fused) ---
    # TODO(synk): LoRA class not given in the snippet; assume delta = (x @ A) @ B, rank=8, scale=1.
    gates_rows = jnp.repeat(
        jnp.broadcast_to(g[:, None, :], (b, s, routers)).reshape(b * s, routers),
        lora_rank, axis=-1)                                                # (B*S, R*r)
    x2_plus_a = lora_adapters(x2, params["lora_a"], params["lora_b"], gates_rows)

    # --- FFN: LN2 -> (ffn1 + bias + GELU) -> (ffn2 + bias + final residual) ---
    hdn = layernorm(x2, params["ln2_g"], params["ln2_b"], out_dtype=jnp.bfloat16)
    hdn = fused_linear(hdn, params["w_ffn1"], bias=params["b_ffn1"],
                       activation="gelu", out_dtype=jnp.bfloat16)          # (B*S, 4D) bf16
    x3 = fused_linear(hdn, params["w_ffn2"], bias=params["b_ffn2"],
                      residual=x2_plus_a)                                  # (B*S, D) f32
    # ffn dropouts are identity in eval mode

    return x3.reshape(b, s, d), g


# ----------------------------------------------------------------------------
# Deterministic parameter init
# ----------------------------------------------------------------------------
def init_params(key, d_model, n_head, routers, lora_rank=8):
    del n_head
    num_keys = 8 + 2 * routers
    ks = list(jax.random.split(key, num_keys))

    def uni(k, fan_in, shape):
        bound = 1.0 / math.sqrt(fan_in)
        return jax.random.uniform(k, shape, jnp.float32, -bound, bound)

    it = iter(ks)
    p = {}
    p["w_qkv"] = uni(next(it), d_model, (d_model, 3 * d_model))
    p["w_o"] = uni(next(it), d_model, (d_model, d_model))
    p["w_ffn1"] = uni(next(it), d_model, (d_model, 4 * d_model))
    p["b_ffn1"] = uni(next(it), d_model, (4 * d_model,))
    p["w_ffn2"] = uni(next(it), 4 * d_model, (4 * d_model, d_model))
    p["b_ffn2"] = uni(next(it), 4 * d_model, (d_model,))
    p["w_router"] = uni(next(it), d_model, (d_model, routers))
    p["b_router"] = uni(next(it), d_model, (routers,))
    p["ln1_g"] = jnp.ones((d_model,), jnp.float32)
    p["ln1_b"] = jnp.zeros((d_model,), jnp.float32)
    p["ln2_g"] = jnp.ones((d_model,), jnp.float32)
    p["ln2_b"] = jnp.zeros((d_model,), jnp.float32)
    a_list, b_list = [], []
    for _ in range(routers):
        a_list.append(uni(next(it), d_model, (d_model, lora_rank)))
        b_list.append(uni(next(it), lora_rank, (lora_rank, d_model)))
    p["lora_a"] = jnp.concatenate(a_list, axis=1)     # (D, R*r)
    p["lora_b"] = jnp.concatenate(b_list, axis=0)     # (R*r, D)
    p["tau"] = jnp.float32(1.0)
    return p


if __name__ == "__main__":
    B, S, D, H, R = 2, 16, 32, 4, 2  # batch, seq, d_model, n_head, routers
    key = jax.random.PRNGKey(0)
    kx, kp = jax.random.split(key)
    x = jax.random.normal(kx, (B, S, D), jnp.float32)
    params = init_params(kp, D, H, R)

    x3, g = flash_attention_block_forward(params, x, n_head=H, routers=R)
    jax.block_until_ready((x3, g))

    assert x3.shape == (B, S, D) and g.shape == (B, R)
    assert bool(jnp.all(jnp.isfinite(x3))) and bool(jnp.all(jnp.isfinite(g)))
    print("KERNEL_OK")
</pallas_src>

<mosaic_0001>
module attributes {stable_mosaic.version = 11 : i64} {
  func.func @_matmul_kernel(%arg0: i32, %arg1: i32, %arg2: i32, %arg3: memref<32x32xbf16, #tpu.memory_space<vmem>>, %arg4: memref<32x96xbf16, #tpu.memory_space<vmem>>, %arg5: memref<32x96xbf16, #tpu.memory_space<vmem>>, %arg6: memref<32x96xf32, #tpu.memory_space<vmem>>) attributes {dimension_semantics = [#tpu.dimension_semantics<parallel>, #tpu.dimension_semantics<parallel>, #tpu.dimension_semantics<arbitrary>], iteration_bounds = array<i64: 1, 1, 1>, scalar_prefetch = 0 : i64, scratch_operands = 1 : i64, tpu.core_type = #tpu.core_type<tc>, window_params = [{transform_indices = @transform_0, window_bounds = array<i64: 32, 32>}, {transform_indices = @transform_1, window_bounds = array<i64: 32, 96>}, {transform_indices = @transform_2, window_bounds = array<i64: 32, 96>}]} {
    %c0_i32 = arith.constant 0 : i32
    %0 = arith.cmpi eq, %arg2, %c0_i32 : i32
    %1 = arith.extui %0 : i1 to i32
    %c0_i32_0 = arith.constant 0 : i32
    %2 = arith.cmpi ne, %1, %c0_i32_0 : i32
    scf.if %2 {
      %cst_10 = arith.constant 0.000000e+00 : f32
      %12 = vector.broadcast %cst_10 : f32 to vector<32x96xf32>
      %c0_11 = arith.constant 0 : index
      %c0_12 = arith.constant 0 : index
      %13 = vector.load %arg6[%c0_11, %c0_12] : memref<32x96xf32, #tpu.memory_space<vmem>>, vector<32x96xf32>
      tpu.vector_store %arg6[%c0_11, %c0_12], %12 {strides = array<i32>} : memref<32x96xf32, #tpu.memory_space<vmem>>, vector<32x96xf32>,
    } else {
    }
    %c0 = arith.constant 0 : index
    %c0_1 = arith.constant 0 : index
    %3 = vector.load %arg6[%c0, %c0_1] : memref<32x96xf32, #tpu.memory_space<vmem>>, vector<32x96xf32>
    %c0_2 = arith.constant 0 : index
    %c0_3 = arith.constant 0 : index
    %4 = vector.load %arg3[%c0_2, %c0_3] : memref<32x32xbf16, #tpu.memory_space<vmem>>, vector<32x32xbf16>
    %c0_4 = arith.constant 0 : index
    %c0_5 = arith.constant 0 : index
    %5 = vector.load %arg4[%c0_4, %c0_5] : memref<32x96xbf16, #tpu.memory_space<vmem>>, vector<32x96xbf16>
    %cst = arith.constant dense<0.000000e+00> : vector<32x96xf32>
    %6 = tpu.matmul %4, %5, %cst {dimension_numbers = #tpu.dot_dimension_numbers<[1], [0], [0], [1], [0, 0, 1, 1], [], []>} : vector<32x32xbf16>, vector<32x96xbf16>, vector<32x96xf32> -> vector<32x96xf32>
    %7 = arith.addf %3, %6 : vector<32x96xf32>
    %c0_6 = arith.constant 0 : index
    %c0_7 = arith.constant 0 : index
    %8 = vector.load %arg6[%c0_6, %c0_7] : memref<32x96xf32, #tpu.memory_space<vmem>>, vector<32x96xf32>
    tpu.vector_store %arg6[%c0_6, %c0_7], %7 {strides = array<i32>} : memref<32x96xf32, #tpu.memory_space<vmem>>, vector<32x96xf32>,
    %c0_i32_8 = arith.constant 0 : i32
    %9 = arith.cmpi eq, %arg2, %c0_i32_8 : i32
    %10 = arith.extui %9 : i1 to i32
    %c0_i32_9 = arith.constant 0 : i32
    %11 = arith.cmpi ne, %10, %c0_i32_9 : i32
    scf.if %11 {
      %c0_10 = arith.constant 0 : index
      %c0_11 = arith.constant 0 : index
      %12 = vector.load %arg6[%c0_10, %c0_11] : memref<32x96xf32, #tpu.memory_space<vmem>>, vector<32x96xf32>
      %13 = arith.truncf %12 : vector<32x96xf32> to vector<32x96xbf16>
      %c0_12 = arith.constant 0 : index
      %c0_13 = arith.constant 0 : index
      %14 = vector.load %arg5[%c0_12, %c0_13] : memref<32x96xbf16, #tpu.memory_space<vmem>>, vector<32x96xbf16>
      tpu.vector_store %arg5[%c0_12, %c0_13], %13 {strides = array<i32>} : memref<32x96xbf16, #tpu.memory_space<vmem>>, vector<32x96xbf16>,
    } else {
    }
    return
  }
  func.func @transform_0(%arg0: i32, %arg1: i32, %arg2: i32) -> (i32, i32) {
    %c0_i32 = arith.constant 0 : i32
    return %arg0, %arg2 : i32, i32
  }
  func.func @transform_1(%arg0: i32, %arg1: i32, %arg2: i32) -> (i32, i32) {
    %c0_i32 = arith.constant 0 : i32
    return %arg2, %arg1 : i32, i32
  }
  func.func @transform_2(%arg0: i32, %arg1: i32, %arg2: i32) -> (i32, i32) {
    %c0_i32 = arith.constant 0 : i32
    return %arg0, %arg1 : i32, i32
  }
}

</mosaic_0001>

<llo_original>
// kernel: tpu_custom_call.1
$region0: #{tpu_custom_call.1}
  #allocation0 [shape = 'u32[]', space=smem, size = 0x4, offset = 0x4, fixed_abs, tag = 'smem constant byte address 0x4 - core index']
  #allocation1 [shape = 'u32[144,128]{1,0:T(1,128)}', space=vmem, size = 0x12000, scoped, tag = 'internal scratch']
  #allocation2 [shape = 'f32[32,96]{1,0:T(8,128)}', space=vmem, size = 0x4000, scoped, tag = 'scratch operand']
  %s0 = inlined_call_operand.hbm [shape: bf16[32,32], index: 0, kind: input, shape index: {}]
  %s1 = inlined_call_operand.hbm [shape: bf16[32,96], index: 1, kind: input, shape index: {}]
  %s2 = inlined_call_operand.hbm [shape: bf16[32,96], index: 2, kind: output, shape index: {}]
  %s3 = sld [smem:[#allocation0]]
  $region34: #{tpu_custom_call.1} parent=0
    _
  %s5 = ssub.s32 1, %s3
  %s6 = scalar_select 0, %s5, %s3
  $region1: #{tpu_custom_call.1} parent=0
    #allocation3 [shape = 'u8[8192]{0}', space=vmem, size = 0x2000, scoped, tag = 'input window, operand 0, single buffered']
    #allocation4 [shape = 's32[1]{0}', space=sflag, size = 0x4, scoped, tag = 'scoped memory for tpu_custom_call.1']
    #allocation5 [shape = 's32[1]{0}', space=sflag, size = 0x4, scoped, tag = 'scoped memory for tpu_custom_call.1']
    #allocation6 [shape = 'u8[8192]{0}', space=vmem, size = 0x2000, scoped, tag = 'input window, operand 1, single buffered']
    #allocation7 [shape = 's32[1]{0}', space=sflag, size = 0x4, scoped, tag = 'scoped memory for tpu_custom_call.1']
    #allocation8 [shape = 'u8[8192]{0}', space=vmem, size = 0x2000, scoped, tag = 'output window, operand 0, single buffered']
    %7 = vsyncpa [#allocation4], 0
    %8 = vsyncpa [#allocation7], 0
    %9 = vsyncpa [#allocation5], 0
    // Predicated region
    $region2: #{tpu_custom_call.1} parent=1 // pred_check
      _
    $region3: #{tpu_custom_call.1} parent=1 // pred_check_branch
      %11 = sbr.rel (0) target = $region5
    $region4: #{tpu_custom_call.1} parent=1 // pred_region
      %s13 = ssub.s32 256, 256
      %14 = vsyncadd [#allocation4], %s13
      %s15 = sshll.u32 [#allocation3], 4
      %s16 = int_to_ptr.vmem [resolvable:$true] %s15
      %21 = dma.hbm_to_vmem [thread:$0]  %s0, 256, %s16, [#allocation4], 64, 64, 4
    $region5: #{tpu_custom_call.1} parent=1 // pred_fallthru
      _
    // Predicated region
    $region6: #{tpu_custom_call.1} parent=1 // pred_check
      _
    $region7: #{tpu_custom_call.1} parent=1 // pred_check_branch
      %23 = sbr.rel (0) target = $region9
    $region8: #{tpu_custom_call.1} parent=1 // pred_region
      %s25 = ssub.s32 256, 256
      %26 = vsyncadd [#allocation7], %s25
      %s27 = sshll.u32 [#allocation6], 4
      %s28 = int_to_ptr.vmem [resolvable:$true] %s27
      %33 = dma.hbm_to_vmem [thread:$0]  %s1, 256, %s28, [#allocation7], 64, 64, 4
    $region9: #{tpu_custom_call.1} parent=1 // pred_fallthru
      _
    // Predicated region
    $region10: #{tpu_custom_call.1} parent=1 // pred_check
      _
    $region11: #{tpu_custom_call.1} parent=1 // pred_check_branch
      %35 = sbr.rel (0) target = $region13
    $region12: #{tpu_custom_call.1} parent=1 // pred_region
      %36 = dma.done [#allocation4], 256
    $region13: #{tpu_custom_call.1} parent=1 // pred_fallthru
      _
    // Predicated region
    $region14: #{tpu_custom_call.1} parent=1 // pred_check
      _
    $region15: #{tpu_custom_call.1} parent=1 // pred_check_branch
      %38 = sbr.rel (0) target = $region17
    $region16: #{tpu_custom_call.1} parent=1 // pred_region
      %39 = dma.done [#allocation7], 256
    $region17: #{tpu_custom_call.1} parent=1 // pred_fallthru
      _
    %p41 = scmp.eq.s32.totalorder 0, 0
    // Predicated region
    $region18: #{tpu_custom_call.1} parent=1 // pred_check
      %p42 = pneg %p41
    $region19: #{tpu_custom_call.1} parent=1 // pred_check_branch
      %44 = sbr.rel (%p42) target = $region21
    $region20: #{tpu_custom_call.1} parent=1 // pred_region
      %vm45 = vcmask 785408
      %46 = vst.msk [vmem:[#allocation2] sm:$0xff] %vm45, 0.0
      %47 = vst.msk [vmem:[#allocation2 + $0x8] sm:$0xff] %vm45, 0.0
      %48 = vst.msk [vmem:[#allocation2 + $0x10] sm:$0xff] %vm45, 0.0
      %49 = vst.msk [vmem:[#allocation2 + $0x18] sm:$0xff] %vm45, 0.0
    $region21: #{tpu_custom_call.1} parent=1 // pred_fallthru
      _
    %v50 = vld [vmem:[#allocation2] sm:$0xff]
    %v51 = vld [vmem:[#allocation2 + $0x8] sm:$0xff]
    %v52 = vld [vmem:[#allocation2 + $0x10] sm:$0xff]
    %v53 = vld [vmem:[#allocation2 + $0x18] sm:$0xff]
    %v54 = vld [vmem:[#allocation3] sm:$0xf]
    %v55 = vld [vmem:[#allocation3 + $0x4] sm:$0xf]
    %v56 = vld [vmem:[#allocation3 + $0x8] sm:$0xf]
    %v57 = vld [vmem:[#allocation3 + $0xc] sm:$0xf]
    %v58 = vld [vmem:[#allocation6] sm:$0xf]
    %v59 = vld [vmem:[#allocation6 + $0x4] sm:$0xf]
    %v60 = vld [vmem:[#allocation6 + $0x8] sm:$0xf]
    %v61 = vld [vmem:[#allocation6 + $0xc] sm:$0xf]
    %v66 = vunpack.c.l.b16 %v54
    %v67 = vunpack.c.l.b16 %v55
    %v68 = vunpack.c.l.b16 %v56
    %v69 = vunpack.c.l.b16 %v57
    %v70 = vpack.c.b16 %v67, %v66
    %v71 = vpack.c.b16 %v69, %v68
    %v76 = vunpack.c.l.b16 %v58
    %v77 = vunpack.c.l.b16 %v59
    %v78 = vunpack.c.l.b16 %v60
    %v79 = vunpack.c.l.b16 %v61
    %v80 = vpack.c.b16 %v77, %v76
    %v81 = vpack.c.b16 %v79, %v78
    %vm84 = vcmask 261120
    %v86 = vsel %vm84, %v70, 0
    %v89 = vsel %vm84, %v71, 0
    %91 = vmatprep.subr.bf16.mxu0 0
    %92 = vmatpush1.bf16.msra.mxu0 0
    %93 = vmatprep.subr.bf16.mxu0 0
    %94 = vmatpush1.bf16.msra.mxu0 0
    %95 = vmatprep.subr.bf16.mxu0 0
    %96 = vmatpush1.bf16.msra.mxu0 0
    %97 = vmatprep.subr.bf16.mxu0 0
    %98 = vmatpush1.bf16.msra.mxu0 0
    %99 = vmatprep.subr.bf16.mxu0 0
    %100 = vmatpush1.bf16.msra.mxu0 0
    %101 = vmatprep.subr.bf16.mxu0 0
    %102 = vmatpush1.bf16.msra.mxu0 0
    %103 = vmatprep.subr.bf16.mxu0 0
    %104 = vmatpush1.bf16.msra.mxu0 %v81
    %105 = vmatprep.subr.bf16.mxu0 0
    %106 = vmatpush1.bf16.msra.mxu0 %v80
    %107 = vmatprep.subr.bf16.mxu0 0
    %108 = vmatpush2.bf16.msra.mxu0 0
    %109 = vmatprep.subr.bf16.mxu0 0
    %110 = vmatpush2.bf16.msra.mxu0 0
    %111 = vmatprep.subr.bf16.mxu0 0
    %112 = vmatpush2.bf16.msra.mxu0 0
    %113 = vmatprep.subr.bf16.mxu0 0
    %114 = vmatpush2.bf16.msra.mxu0 0
    %115 = vmatprep.subr.bf16.mxu0 0
    %116 = vmatpush2.bf16.msra.mxu0 0
    %117 = vmatprep.subr.bf16.mxu0 0
    %118 = vmatpush2.bf16.msra.mxu0 0
    %119 = vmatprep.subr.bf16.mxu0 0
    %120 = vmatpush2.bf16.msra.mxu0 0
    %121 = vmatprep.subr.bf16.mxu0 0
    %122 = vmatpush2.bf16.msra.mxu0 0
    %123 = vmatprep.mubr.bf16.mxu0 0
    %124 = vmatmul.mubr.bf16.gmra.mxu0 %v86
    %v125 = vpop.f32.mrf.mxu0
    %v126 = vadd.f32 0.0, %v125
    %v127 = vpop.f32.mrf.mxu0
    %v128 = vpop.f32.mrf.mxu0
    %v129 = vadd.f32 0.0, %v128
    %v130 = vpop.f32.mrf.mxu0
    %131 = vmatprep.mubr.bf16.mxu0 0
    %132 = vmatmul.mubr.bf16.gmra.mxu0 %v89
    %v133 = vpop.f32.mrf.mxu0
    %v134 = vadd.f32 0.0, %v133
    %v135 = vpop.f32.mrf.mxu0
    %v136 = vpop.f32.mrf.mxu0
    %v137 = vadd.f32 0.0, %v136
    %v138 = vpop.f32.mrf.mxu0
    %139 = vdwg.mxu0
    %v140 = vadd.f32 %v50, %v126
    %v141 = vadd.f32 %v51, %v129
    %v142 = vadd.f32 %v52, %v134
    %v143 = vadd.f32 %v53, %v137
    %vm144 = vcmask 785408
    %145 = vst.msk [vmem:[#allocation2] sm:$0xff] %vm144, %v140
    %146 = vst.msk [vmem:[#allocation2 + $0x8] sm:$0xff] %vm144, %v141
    %147 = vst.msk [vmem:[#allocation2 + $0x10] sm:$0xff] %vm144, %v142
    %148 = vst.msk [vmem:[#allocation2 + $0x18] sm:$0xff] %vm144, %v143
    // Predicated region
    $region22: #{tpu_custom_call.1} parent=1 // pred_check
      %p149 = pneg %p41
    $region23: #{tpu_custom_call.1} parent=1 // pred_check_branch
      %151 = sbr.rel (%p149) target = $region25
    $region24: #{tpu_custom_call.1} parent=1 // pred_region
      %v152 = vld [vmem:[#allocation2] sm:$0xff]
      %v153 = vld [vmem:[#allocation2 + $0x8] sm:$0xff]
      %v154 = vld [vmem:[#allocation2 + $0x10] sm:$0xff]
      %v155 = vld [vmem:[#allocation2 + $0x18] sm:$0xff]
      %v156 = vpack.c.bf16 %v153, %v152
      %v157 = vpack.c.bf16 %v155, %v154
      %v160 = vunpack.c.l.b16 %v156
      %v161 = vunpack.c.h.b16 %v156
      %v162 = vunpack.c.l.b16 %v157
      %v163 = vunpack.c.h.b16 %v157
      %v164 = vpack.c.b16 %v160, %v160
      %v165 = vpack.c.b16 %v161, %v161
      %v166 = vpack.c.b16 %v162, %v162
      %v167 = vpack.c.b16 %v163, %v163
      %vm172 = vcmask 781312
      %173 = vst.msk [vmem:[#allocation8] sm:$0xf] %vm172, %v164
      %174 = vst.msk [vmem:[#allocation8 + $0x4] sm:$0xf] %vm172, %v165
      %175 = vst.msk [vmem:[#allocation8 + $0x8] sm:$0xf] %vm172, %v166
      %176 = vst.msk [vmem:[#allocation8 + $0xc] sm:$0xf] %vm172, %v167
    $region25: #{tpu_custom_call.1} parent=1 // pred_fallthru
      _
    // Predicated region
    $region26: #{tpu_custom_call.1} parent=1 // pred_check
      _
    $region27: #{tpu_custom_call.1} parent=1 // pred_check_branch
      %178 = sbr.rel (0) target = $region29
    $region28: #{tpu_custom_call.1} parent=1 // pred_region
      %s180 = ssub.s32 256, 256
      %181 = vsyncadd [#allocation5], %s180
      %s182 = sshll.u32 [#allocation8], 4
      %s183 = int_to_ptr.vmem [resolvable:$true] %s182
      %188 = dma.vmem_to_hbm [thread:$0]  %s183, 256, %s2, [#allocation5], 64, 64, 4
    $region29: #{tpu_custom_call.1} parent=1 // pred_fallthru
      _
    // Predicated region
    $region30: #{tpu_custom_call.1} parent=1 // pred_check
      _
    $region31: #{tpu_custom_call.1} parent=1 // pred_check_branch
      %190 = sbr.rel (0) target = $region33
    $region32: #{tpu_custom_call.1} parent=1 // pred_region
      %191 = dma.done [#allocation5], 256
    $region33: #{tpu_custom_call.1} parent=1 // pred_fallthru
      _
    %192 = vsyncpa [#allocation4], 1
    %193 = vsyncpa [#allocation7], 1
    %194 = vsyncpa [#allocation5], 1

</llo_original>
